<compile_context>
chip_gen: v5e
topology: v5e:2x2
jax: 0.10.0
libtpu: 0.0.40
codegen_flags: <defaults>
</compile_context>

<pallas_src>
import math
from functools import partial

import jax
import jax.numpy as jnp
from jax import lax
from jax.experimental import pallas as pl
from jax.experimental.pallas import tpu as pltpu


# ----------------------------------------------------------------------------
# Row-tiled linear projection kernel: y = x @ Wt + b
# ----------------------------------------------------------------------------
def _linear_kernel(x_ref, w_ref, b_ref, o_ref, *, matmul_dtype):
    x = x_ref[...]
    w = w_ref[...]
    if matmul_dtype is not None:
        x = x.astype(matmul_dtype)
        w = w.astype(matmul_dtype)
    y = jnp.dot(x, w, preferred_element_type=jnp.float32)
    o_ref[...] = (y + b_ref[...]).astype(o_ref.dtype)


def linear_pallas(x2d, wt, b, *, block_rows=512, matmul_dtype=None):
    """x2d: (N, Din); wt: (Din, Dout) pre-transposed; b: (Dout,)."""
    n, d_in = x2d.shape
    d_out = wt.shape[1]
    b2 = b.reshape(1, d_out)
    tm = min(block_rows, n)            # full array if small, else 512-row tiles
    grid = (pl.cdiv(n, tm),)
    return pl.pallas_call(
        partial(_linear_kernel, matmul_dtype=matmul_dtype),
        out_shape=jax.ShapeDtypeStruct((n, d_out), x2d.dtype),
        grid=grid,
        in_specs=[
            pl.BlockSpec((tm, d_in), lambda i: (i, 0)),
            pl.BlockSpec((d_in, d_out), lambda i: (0, 0)),   # weight resident
            pl.BlockSpec((1, d_out), lambda i: (0, 0)),      # bias resident
        ],
        out_specs=pl.BlockSpec((tm, d_out), lambda i: (i, 0)),
        compiler_params=pltpu.CompilerParams(
            dimension_semantics=("parallel",),
            vmem_limit_bytes=32 << 20,
        ),
    )(x2d, wt, b2)


# ----------------------------------------------------------------------------
# Full attention: one batch element (all heads) per grid step.
# ----------------------------------------------------------------------------
def _attention_kernel(q_ref, k_ref, v_ref, o_ref, *rest,
                      H, dk, dv, scale, matmul_dtype):
    a_ref = rest[0] if rest else None
    for h in range(H):                              # static unroll over heads
        qh = q_ref[0, :, h * dk:(h + 1) * dk]       # (L, dk)
        kh = k_ref[0, :, h * dk:(h + 1) * dk]       # (S, dk)
        vh = v_ref[0, :, h * dv:(h + 1) * dv]       # (S, dv)
        if matmul_dtype is not None:
            qh = qh.astype(matmul_dtype)
            kh = kh.astype(matmul_dtype)
            vh = vh.astype(matmul_dtype)
        # QK^T without an in-kernel transpose: contract dim 1 with dim 1.
        s = lax.dot_general(qh, kh, (((1,), (1,)), ((), ())),
                            preferred_element_type=jnp.float32) * scale   # (L, S)
        m = jnp.max(s, axis=-1, keepdims=True)
        p = jnp.exp(s - m)
        denom = jnp.sum(p, axis=-1, keepdims=True)
        a = p * pl.reciprocal(denom, approx=True)                          # (L, S)
        av_in = a.astype(matmul_dtype) if matmul_dtype is not None else a
        o = jnp.dot(av_in, vh, preferred_element_type=jnp.float32)         # (L, dv)
        o_ref[0, :, h * dv:(h + 1) * dv] = o.astype(o_ref.dtype)
        if a_ref is not None:
            a_ref[0, h] = a.astype(a_ref.dtype)


def full_attention_pallas(q, k, v, n_heads, *, output_attention=True,
                          matmul_dtype=None, attn_dtype=None):
    """q: (B, L, H*dk), k: (B, S, H*dk), v: (B, S, H*dv) — head-splitting done in-kernel.

    Returns out: (B, L, H*dv) and attn: (B, H, L, S) (or None)."""
    B, L, Hdk = q.shape
    S = k.shape[1]
    Hdv = v.shape[2]
    H = n_heads
    dk = Hdk // H
    dv = Hdv // H
    scale = 1.0 / math.sqrt(dk)
    attn_dtype = attn_dtype or q.dtype

    kern = partial(_attention_kernel, H=H, dk=dk, dv=dv, scale=scale,
                   matmul_dtype=matmul_dtype)

    out_shapes = [jax.ShapeDtypeStruct((B, L, Hdv), q.dtype)]
    out_specs = [pl.BlockSpec((1, L, Hdv), lambda b: (b, 0, 0))]
    if output_attention:
        out_shapes.append(jax.ShapeDtypeStruct((B, H, L, S), attn_dtype))
        out_specs.append(pl.BlockSpec((1, H, L, S), lambda b: (b, 0, 0, 0)))

    res = pl.pallas_call(
        kern,
        out_shape=tuple(out_shapes),
        grid=(B,),
        in_specs=[
            pl.BlockSpec((1, L, Hdk), lambda b: (b, 0, 0)),
            pl.BlockSpec((1, S, Hdk), lambda b: (b, 0, 0)),
            pl.BlockSpec((1, S, Hdv), lambda b: (b, 0, 0)),
        ],
        out_specs=tuple(out_specs),
        compiler_params=pltpu.CompilerParams(
            dimension_semantics=("parallel",),
            vmem_limit_bytes=32 << 20,
        ),
    )(q, k, v)

    if output_attention:
        out, attn = res
        return out, attn
    (out,) = res
    return out, None


# ----------------------------------------------------------------------------
# AttentionLayer wrapper (projections + inner attention + output projection)
# ----------------------------------------------------------------------------
def init_attention_layer_params(key, d_model, n_heads, d_keys=None, d_values=None):
    d_keys = d_keys or d_model // n_heads
    d_values = d_values or d_model // n_heads
    ks = jax.random.split(key, 8)

    def lin(kw, kb, out_dim, in_dim):
        bound = 1.0 / math.sqrt(in_dim)
        w = jax.random.uniform(kw, (out_dim, in_dim), jnp.float32, -bound, bound)
        b = jax.random.uniform(kb, (out_dim,), jnp.float32, -bound, bound)
        # Store pre-transposed (Din, Dout): no per-forward transpose in HBM.
        return jnp.transpose(w), b

    return {
        "q_proj": lin(ks[0], ks[1], d_keys * n_heads, d_model),
        "k_proj": lin(ks[2], ks[3], d_keys * n_heads, d_model),
        "v_proj": lin(ks[4], ks[5], d_values * n_heads, d_model),
        "o_proj": lin(ks[6], ks[7], d_model, d_values * n_heads),
        "n_heads": n_heads,
        "d_keys": d_keys,
        "d_values": d_values,
    }


def attention_layer_forward(params, queries, keys, values, attn_mask=None, *,
                            output_attention=True, matmul_dtype=None):
    # TODO(synk): attn_mask assumed None (FullAttention mask_flag=False path).
    B, L, d_model = queries.shape
    _, S, _ = keys.shape
    H = params["n_heads"]
    dk = params["d_keys"]
    dv = params["d_values"]

    q = linear_pallas(queries.reshape(B * L, d_model), *params["q_proj"],
                      matmul_dtype=matmul_dtype)
    k = linear_pallas(keys.reshape(B * S, d_model), *params["k_proj"],
                      matmul_dtype=matmul_dtype)
    v = linear_pallas(values.reshape(B * S, d_model), *params["v_proj"],
                      matmul_dtype=matmul_dtype)

    # Pure metadata reshapes — no HBM transposes; heads are split in-kernel.
    q = q.reshape(B, L, H * dk)
    k = k.reshape(B, S, H * dk)
    v = v.reshape(B, S, H * dv)

    out, attn = full_attention_pallas(q, k, v, H, output_attention=output_attention,
                                      matmul_dtype=matmul_dtype)

    out = linear_pallas(out.reshape(B * L, H * dv), *params["o_proj"],
                        matmul_dtype=matmul_dtype)
    return out.reshape(B, L, d_model), attn


# ----------------------------------------------------------------------------
# Reference (pure jnp) for sanity
# ----------------------------------------------------------------------------
def reference_forward(params, queries, keys, values):
    B, L, d_model = queries.shape
    _, S, _ = keys.shape
    H, dk, dv = params["n_heads"], params["d_keys"], params["d_values"]
    qw, qb = params["q_proj"]; kw, kb = params["k_proj"]
    vw, vb = params["v_proj"]; ow, ob = params["o_proj"]
    q = (queries @ qw + qb).reshape(B, L, H, dk)
    k = (keys @ kw + kb).reshape(B, S, H, dk)
    v = (values @ vw + vb).reshape(B, S, H, dv)
    scale = 1.0 / math.sqrt(dk)
    scores = jnp.einsum("blhe,bshe->bhls", q, k) * scale
    a = jax.nn.softmax(scores, axis=-1)
    out = jnp.einsum("bhls,bshd->blhd", a, v).reshape(B, L, H * dv)
    return out @ ow + ob, a


if __name__ == "__main__":
    B, L, S, d_model, n_heads = 2, 8, 8, 32, 4

    key = jax.random.PRNGKey(0)
    kp, kq, kk, kv = jax.random.split(key, 4)
    params = init_attention_layer_params(kp, d_model, n_heads)

    queries = jax.random.normal(kq, (B, L, d_model), jnp.float32)
    keys = jax.random.normal(kk, (B, S, d_model), jnp.float32)
    values = jax.random.normal(kv, (B, S, d_model), jnp.float32)

    # f32 path (strict-ish tolerance; softmax denom uses approx reciprocal).
    out, attn = attention_layer_forward(params, queries, keys, values, attn_mask=None)
    out = jax.block_until_ready(out)
    attn = jax.block_until_ready(attn)

    ref_out, ref_attn = reference_forward(params, queries, keys, values)
    assert jnp.allclose(out, ref_out, atol=2e-3, rtol=2e-3)
    assert jnp.allclose(attn, ref_attn, atol=2e-3, rtol=2e-3)

    # bf16 MXU path (f32 accumulation + f32 softmax), attn output dropped.
    out_bf16, attn_none = attention_layer_forward(
        params, queries, keys, values, attn_mask=None,
        output_attention=False, matmul_dtype=jnp.bfloat16)
    out_bf16 = jax.block_until_ready(out_bf16)
    assert attn_none is None
    assert jnp.allclose(out_bf16, ref_out, atol=5e-2, rtol=5e-2)

    print("KERNEL_OK")
</pallas_src>

<mosaic_0001>
module attributes {stable_mosaic.version = 11 : i64} {
  func.func @_linear_kernel(%arg0: i32, %arg1: memref<16x32xf32, #tpu.memory_space<vmem>>, %arg2: memref<32x32xf32, #tpu.memory_space<vmem>>, %arg3: memref<1x32xf32, #tpu.memory_space<vmem>>, %arg4: memref<16x32xf32, #tpu.memory_space<vmem>>) attributes {dimension_semantics = [#tpu.dimension_semantics<parallel>], iteration_bounds = array<i64: 1>, scalar_prefetch = 0 : i64, scratch_operands = 0 : i64, tpu.core_type = #tpu.core_type<tc>, window_params = [{transform_indices = @transform_0, window_bounds = array<i64: 16, 32>}, {pipeline_mode = #tpu.pipeline_mode<synchronous>, transform_indices = @transform_1, window_bounds = array<i64: 32, 32>}, {pipeline_mode = #tpu.pipeline_mode<synchronous>, transform_indices = @transform_2, window_bounds = array<i64: 1, 32>}, {transform_indices = @transform_3, window_bounds = array<i64: 16, 32>}]} {
    %c0 = arith.constant 0 : index
    %c0_0 = arith.constant 0 : index
    %0 = vector.load %arg1[%c0, %c0_0] : memref<16x32xf32, #tpu.memory_space<vmem>>, vector<16x32xf32>
    %c0_1 = arith.constant 0 : index
    %c0_2 = arith.constant 0 : index
    %1 = vector.load %arg2[%c0_1, %c0_2] : memref<32x32xf32, #tpu.memory_space<vmem>>, vector<32x32xf32>
    %cst = arith.constant dense<0.000000e+00> : vector<16x32xf32>
    %2 = tpu.matmul %0, %1, %cst {dimension_numbers = #tpu.dot_dimension_numbers<[1], [0], [0], [1], [0, 0, 1, 1], [], []>} : vector<16x32xf32>, vector<32x32xf32>, vector<16x32xf32> -> vector<16x32xf32>
    %c0_3 = arith.constant 0 : index
    %c0_4 = arith.constant 0 : index
    %3 = vector.load %arg3[%c0_3, %c0_4] : memref<1x32xf32, #tpu.memory_space<vmem>>, vector<1x32xf32>
    %4 = vector.broadcast %3 : vector<1x32xf32> to vector<16x32xf32>
    %5 = arith.addf %2, %4 : vector<16x32xf32>
    %c0_5 = arith.constant 0 : index
    %c0_6 = arith.constant 0 : index
    %6 = vector.load %arg4[%c0_5, %c0_6] : memref<16x32xf32, #tpu.memory_space<vmem>>, vector<16x32xf32>
    tpu.vector_store %arg4[%c0_5, %c0_6], %5 {strides = array<i32>} : memref<16x32xf32, #tpu.memory_space<vmem>>, vector<16x32xf32>,
    return
  }
  func.func @transform_0(%arg0: i32) -> (i32, i32) {
    %c0_i32 = arith.constant 0 : i32
    %c0_i32_0 = arith.constant 0 : i32
    return %arg0, %c0_i32 : i32, i32
  }
  func.func @transform_1(%arg0: i32) -> (i32, i32) {
    %c0_i32 = arith.constant 0 : i32
    %c0_i32_0 = arith.constant 0 : i32
    %c0_i32_1 = arith.constant 0 : i32
    return %c0_i32, %c0_i32_0 : i32, i32
  }
  func.func @transform_2(%arg0: i32) -> (i32, i32) {
    %c0_i32 = arith.constant 0 : i32
    %c0_i32_0 = arith.constant 0 : i32
    %c0_i32_1 = arith.constant 0 : i32
    return %c0_i32, %c0_i32_0 : i32, i32
  }
  func.func @transform_3(%arg0: i32) -> (i32, i32) {
    %c0_i32 = arith.constant 0 : i32
    %c0_i32_0 = arith.constant 0 : i32
    return %arg0, %c0_i32 : i32, i32
  }
}

</mosaic_0001>

<llo_original>
// kernel: tpu_custom_call.1
$region0: #{tpu_custom_call.1}
  #allocation0 [shape = 'u32[]', space=smem, size = 0x4, offset = 0x4, fixed_abs, tag = 'smem constant byte address 0x4 - core index']
  #allocation1 [shape = 'u32[72,128]{1,0:T(1,128)}', space=vmem, size = 0x9000, scoped, tag = 'internal scratch']
  %s0 = inlined_call_operand.hbm [shape: f32[16,32], index: 0, kind: input, shape index: {}]
  %s1 = inlined_call_operand.hbm [shape: f32[32,32], index: 1, kind: input, shape index: {}]
  %s2 = inlined_call_operand.vmem [shape: f32[1,32], index: 2, kind: input, shape index: {}]
  %s3 = inlined_call_operand.hbm [shape: f32[16,32], index: 3, kind: output, shape index: {}]
  %s4 = sld [smem:[#allocation0]]
  $region30: #{tpu_custom_call.1} parent=0
    _
  %s6 = ssub.s32 1, %s4
  %s7 = scalar_select 0, %s6, %s4
  $region1: #{tpu_custom_call.1} parent=0
    #allocation2 [shape = 'u8[8192]{0}', space=vmem, size = 0x2000, scoped, tag = 'input window, operand 0, single buffered']
    #allocation3 [shape = 's32[1]{0}', space=sflag, size = 0x4, scoped, tag = 'scoped memory for tpu_custom_call.1']
    #allocation4 [shape = 's32[1]{0}', space=sflag, size = 0x4, scoped, tag = 'scoped memory for tpu_custom_call.1']
    #allocation5 [shape = 'u8[16384]{0}', space=vmem, size = 0x4000, scoped, tag = 'input window, operand 1, single buffered']
    #allocation6 [shape = 's32[1]{0}', space=sflag, size = 0x4, scoped, tag = 'scoped memory for tpu_custom_call.1']
    #allocation7 [shape = 'u8[8192]{0}', space=vmem, size = 0x2000, scoped, tag = 'output window, operand 0, single buffered']
    %8 = vsyncpa [#allocation3], 0
    %9 = vsyncpa [#allocation6], 0
    %10 = vsyncpa [#allocation4], 0
    // Predicated region
    $region2: #{tpu_custom_call.1} parent=1 // pred_check
      _
    $region3: #{tpu_custom_call.1} parent=1 // pred_check_branch
      %12 = sbr.rel (0) target = $region5
    $region4: #{tpu_custom_call.1} parent=1 // pred_region
      %14 = vsyncadd [#allocation3], 0
      %s15 = sshll.u32 %s0, 4
      %s16 = int_to_ptr.hbm [resolvable:$true] %s15
      %s17 = sshll.u32 [#allocation2], 4
      %s18 = int_to_ptr.vmem [resolvable:$true] %s17
      %23 = dma.hbm_to_vmem [thread:$0]  %s16, 256, %s18, [#allocation3], 128, 128, 8
    $region5: #{tpu_custom_call.1} parent=1 // pred_fallthru
      _
    // Predicated region
    $region6: #{tpu_custom_call.1} parent=1 // pred_check
      _
    $region7: #{tpu_custom_call.1} parent=1 // pred_check_branch
      %25 = sbr.rel (0) target = $region9
    $region8: #{tpu_custom_call.1} parent=1 // pred_region
      %27 = vsyncadd [#allocation6], 0
      %s28 = sshll.u32 %s1, 4
      %s29 = int_to_ptr.hbm [resolvable:$true] %s28
      %s30 = sshll.u32 [#allocation5], 4
      %s31 = int_to_ptr.vmem [resolvable:$true] %s30
      %36 = dma.hbm_to_vmem [thread:$0]  %s29, 512, %s31, [#allocation6], 128, 128, 8
    $region9: #{tpu_custom_call.1} parent=1 // pred_fallthru
      _
    // Predicated region
    $region10: #{tpu_custom_call.1} parent=1 // pred_check
      _
    $region11: #{tpu_custom_call.1} parent=1 // pred_check_branch
      %38 = sbr.rel (0) target = $region13
    $region12: #{tpu_custom_call.1} parent=1 // pred_region
      _
    $region13: #{tpu_custom_call.1} parent=1 // pred_fallthru
      _
    // Predicated region
    $region14: #{tpu_custom_call.1} parent=1 // pred_check
      _
    $region15: #{tpu_custom_call.1} parent=1 // pred_check_branch
      %40 = sbr.rel (0) target = $region17
    $region16: #{tpu_custom_call.1} parent=1 // pred_region
      %42 = dma.done [#allocation3], 256
    $region17: #{tpu_custom_call.1} parent=1 // pred_fallthru
      _
    // Predicated region
    $region18: #{tpu_custom_call.1} parent=1 // pred_check
      _
    $region19: #{tpu_custom_call.1} parent=1 // pred_check_branch
      %44 = sbr.rel (0) target = $region21
    $region20: #{tpu_custom_call.1} parent=1 // pred_region
      %46 = dma.done [#allocation6], 512
    $region21: #{tpu_custom_call.1} parent=1 // pred_fallthru
      _
    %v47 = vld [vmem:[#allocation2] sm:$0xff]
    %v48 = vld [vmem:[#allocation2 + $0x8] sm:$0xff]
    %v49 = vld [vmem:[#allocation5] sm:$0xff]
    %v50 = vld [vmem:[#allocation5 + $0x8] sm:$0xff]
    %v51 = vld [vmem:[#allocation5 + $0x10] sm:$0xff]
    %v52 = vld [vmem:[#allocation5 + $0x18] sm:$0xff]
    %v53 = vld [vmem:[%s2] sm:$0x1]
    %v55 = vperm.slane %v53, 0
    %vm57 = vcmask 261120
    %v59 = vsel %vm57, %v47, 0
    %v62 = vsel %vm57, %v48, 0
    %64 = vmatpush.msra.mxu0 0.0
    %65 = vmatpush.msra.mxu0 0.0
    %66 = vmatpush.msra.mxu0 0.0
    %67 = vmatpush.msra.mxu0 0.0
    %68 = vmatpush.msra.mxu0 0.0
    %69 = vmatpush.msra.mxu0 0.0
    %70 = vmatpush.msra.mxu0 0.0
    %71 = vmatpush.msra.mxu0 0.0
    %72 = vmatpush.msra.mxu0 0.0
    %73 = vmatpush.msra.mxu0 0.0
    %74 = vmatpush.msra.mxu0 0.0
    %75 = vmatpush.msra.mxu0 0.0
    %76 = vmatpush.msra.mxu0 %v52
    %77 = vmatpush.msra.mxu0 %v51
    %78 = vmatpush.msra.mxu0 %v50
    %79 = vmatpush.msra.mxu0 %v49
    %80 = vmatmul.f32.gmra.mxu0 %v59
    %v81 = vpop.f32.mrf.mxu0
    %v82 = vadd.f32 %v55, %v81
    %83 = vmatmul.f32.gmra.mxu0 %v62
    %v84 = vpop.f32.mrf.mxu0
    %v85 = vadd.f32 %v55, %v84
    %86 = vdwg.mxu0
    %87 = vst.msk [vmem:[#allocation7] sm:$0xff] %vm57, %v82
    %88 = vst.msk [vmem:[#allocation7 + $0x8] sm:$0xff] %vm57, %v85
    // Predicated region
    $region22: #{tpu_custom_call.1} parent=1 // pred_check
      _
    $region23: #{tpu_custom_call.1} parent=1 // pred_check_branch
      %90 = sbr.rel (0) target = $region25
    $region24: #{tpu_custom_call.1} parent=1 // pred_region
      %92 = vsyncadd [#allocation4], 0
      %s93 = sshll.u32 [#allocation7], 4
      %s94 = int_to_ptr.vmem [resolvable:$true] %s93
      %s95 = sshll.u32 %s3, 4
      %s96 = int_to_ptr.hbm [resolvable:$true] %s95
      %101 = dma.vmem_to_hbm [thread:$0]  %s94, 256, %s96, [#allocation4], 128, 128, 8
    $region25: #{tpu_custom_call.1} parent=1 // pred_fallthru
      _
    // Predicated region
    $region26: #{tpu_custom_call.1} parent=1 // pred_check
      _
    $region27: #{tpu_custom_call.1} parent=1 // pred_check_branch
      %103 = sbr.rel (0) target = $region29
    $region28: #{tpu_custom_call.1} parent=1 // pred_region
      %105 = dma.done [#allocation4], 256
    $region29: #{tpu_custom_call.1} parent=1 // pred_fallthru
      _
    %106 = vsyncpa [#allocation3], 1
    %107 = vsyncpa [#allocation6], 1
    %108 = vsyncpa [#allocation4], 1

</llo_original>
